<compile_context>
chip_gen: v6e
topology: v6e:2x2x1
jax: 0.10.0
libtpu: 0.0.40
codegen_flags: <defaults>
</compile_context>

<pallas_src>
import functools

import jax
import jax.numpy as jnp
from jax.experimental import pallas as pl
from jax.experimental.pallas import tpu as pltpu


def make_positional_encodings(max_seq_len, d_model):
    """Mirrors the PyTorch PositionalEncoder buffer (base 1000, per the spec)."""
    position = jnp.arange(max_seq_len, dtype=jnp.float32)[:, None]            # (L, 1)
    div_term = jnp.power(
        1000.0, 2.0 * jnp.arange(0, d_model, 2, dtype=jnp.float32) / d_model
    )                                                                          # (D/2,)
    pe = jnp.zeros((max_seq_len, d_model), dtype=jnp.float32)
    pe = pe.at[:, 0::2].set(jnp.sin(position / div_term))
    pe = pe.at[:, 1::2].set(jnp.cos(position / div_term))
    return pe                                                                  # (L, D)


def make_pe_repeated(pe_full, batch):
    """Init-time buffer: PE rows repeated over batch so row n == flat token n = s*B + b."""
    return jnp.repeat(pe_full, batch, axis=0)                                  # (L*B, D)


def _embedder_kernel(ids_ref, table_ref, pe_ref, out_ref, rows_vmem, sem, *, n_sem):
    """One grid step: gather `tile_rows` embedding rows from HBM, add PE.

    ids_ref   : (N_pad,) int32, SMEM (scalar prefetch)  -- flattened token ids
    table_ref : (V, D)   f32,  HBM  (memory_space=ANY)  -- embedding table
    pe_ref    : (tile_rows, D) VMEM block               -- PE rows for this tile
    out_ref   : (tile_rows, D) VMEM block               -- output tile
    rows_vmem : (tile_rows, D) VMEM scratch             -- gather landing buffer
    sem       : (n_sem,) DMA semaphores                 -- ring of in-flight copies
    """
    t = pl.program_id(0)
    tile_rows, _ = out_ref.shape
    vocab = table_ref.shape[0]
    base = t * tile_rows

    # Row gather from the HBM-resident table; keep up to `n_sem` DMAs in flight.
    copies = [None] * tile_rows
    for r in range(tile_rows):                      # static unroll (tile_rows kept small)
        if r >= n_sem:
            copies[r - n_sem].wait()                # drain the copy reusing this sem slot
        tok = ids_ref[base + r]
        tok = jnp.clip(tok, 0, vocab - 1)           # nn.Embedding would fault on OOR ids
        cp = pltpu.make_async_copy(
            table_ref.at[pl.ds(tok, 1), :],
            rows_vmem.at[pl.ds(r, 1), :],
            sem.at[r % n_sem],
        )
        cp.start()
        copies[r] = cp
    for r in range(max(0, tile_rows - n_sem), tile_rows):
        copies[r].wait()

    # Fused positional-encoding add; dropout is eval-mode identity.
    out_ref[...] = rows_vmem[...] + pe_ref[...]


def embedder_forward(ids, embed_table, pe_rep, *, tile_rows=None, n_sem=8):
    """ids: (S, B) int -> (S, B, D) f32 == embed_table[ids] + PE[:S] (eval dropout)."""
    S, B = ids.shape
    V, D = embed_table.shape
    N = S * B

    if tile_rows is None:
        tile_rows = min(128, 8 * pl.cdiv(N, 8))
    assert tile_rows % 8 == 0, "tile_rows must be a multiple of 8 (sublane)"
    n_sem = max(1, min(n_sem, tile_rows))

    num_tiles = pl.cdiv(N, tile_rows)
    n_pad = num_tiles * tile_rows

    ids_flat = ids.reshape(-1).astype(jnp.int32)
    if n_pad > N:
        ids_flat = jnp.pad(ids_flat, (0, n_pad - N))   # padded rows gather table row 0
    if pe_rep.shape[0] < n_pad:
        pe_rep = jnp.pad(pe_rep, ((0, n_pad - pe_rep.shape[0]), (0, 0)))

    kernel = functools.partial(_embedder_kernel, n_sem=n_sem)

    out_flat = pl.pallas_call(
        kernel,
        out_shape=jax.ShapeDtypeStruct((n_pad, D), embed_table.dtype),
        grid_spec=pltpu.PrefetchScalarGridSpec(
            num_scalar_prefetch=1,                                     # ids -> SMEM
            grid=(num_tiles,),
            in_specs=[
                pl.BlockSpec(memory_space=pl.ANY),                     # table stays in HBM
                pl.BlockSpec((tile_rows, D), lambda t, ids: (t, 0)),   # PE rows for tile t
            ],
            out_specs=pl.BlockSpec((tile_rows, D), lambda t, ids: (t, 0)),
            scratch_shapes=[
                pltpu.VMEM((tile_rows, D), embed_table.dtype),
                pltpu.SemaphoreType.DMA((n_sem,)),
            ],
        ),
        compiler_params=pltpu.CompilerParams(
            dimension_semantics=("parallel",),     # shard token tiles over v7x's 2 TCs
        ),
    )(ids_flat, embed_table, pe_rep)

    return out_flat[:N].reshape(S, B, D)


if __name__ == "__main__":
    # Small shapes consistent with the module.
    vocab_size = 64
    d_model = 32           # even, as Embedder.__init__ enforces
    max_seq_len = 200
    seq_len = 8
    batch = 2

    key = jax.random.PRNGKey(0)
    k_ids, k_emb = jax.random.split(key)

    ids = jax.random.randint(k_ids, (seq_len, batch), 0, vocab_size, dtype=jnp.int32)
    embed_table = jax.random.normal(k_emb, (vocab_size, d_model), dtype=jnp.float32)

    # Init-time buffers (analogue of the PyTorch registered buffer).
    pe_full = make_positional_encodings(max_seq_len, d_model)   # (L, D)
    pe_rep = make_pe_repeated(pe_full, batch)                   # (L*B, D)

    # tile_rows=8 -> 2 grid steps so the pipeline is exercised even at toy shapes.
    out = embedder_forward(ids, embed_table, pe_rep, tile_rows=8)
    out = jax.block_until_ready(out)

    # Pure-JAX reference (embedding lookup + PE add, eval-mode dropout).
    ref = embed_table[ids] + pe_full[:seq_len][:, None, :]
    assert out.shape == (seq_len, batch, d_model)
    assert jnp.allclose(out, ref, atol=1e-5, rtol=1e-5)

    print("KERNEL_OK")
</pallas_src>

<mosaic_0001>
module attributes {stable_mosaic.version = 11 : i64} {
  func.func @_embedder_kernel(%arg0: i32, %arg1: memref<16xi32, #tpu.memory_space<smem>>, %arg2: memref<64x32xf32, #tpu.memory_space<any>>, %arg3: memref<8x32xf32, #tpu.memory_space<vmem>>, %arg4: memref<8x32xf32, #tpu.memory_space<vmem>>, %arg5: memref<8x32xf32, #tpu.memory_space<vmem>>, %arg6: memref<8x!tpu.dma_semaphore, #tpu.memory_space<semaphore_mem>>) attributes {dimension_semantics = [#tpu.dimension_semantics<parallel>], iteration_bounds = array<i64: 2>, scalar_prefetch = 1 : i64, scratch_operands = 2 : i64, tpu.core_type = #tpu.core_type<tc>, window_params = [{}, {transform_indices = @transform_1, window_bounds = array<i64: 8, 32>}, {transform_indices = @transform_2, window_bounds = array<i64: 8, 32>}]} {
    %c8_i32 = arith.constant 8 : i32
    %0 = arith.muli %arg0, %c8_i32 : i32
    %c0_i32 = arith.constant 0 : i32
    %1 = arith.addi %0, %c0_i32 : i32
    %2 = arith.index_cast %1 : i32 to index
    %3 = memref.load %arg1[%2] : memref<16xi32, #tpu.memory_space<smem>>
    %c0_i32_0 = arith.constant 0 : i32
    %c63_i32 = arith.constant 63 : i32
    %4 = arith.maxsi %c0_i32_0, %3 : i32
    %5 = arith.minsi %c63_i32, %4 : i32
    %c0_i32_1 = arith.constant 0 : i32
    %c0_i32_2 = arith.constant 0 : i32
    %6 = tpu.memref_slice %arg2[%5, %c0_i32_2] : memref<64x32xf32, #tpu.memory_space<any>> -> memref<1x32xf32, #tpu.memory_space<any>>
    %c0_i32_3 = arith.constant 0 : i32
    %c0_i32_4 = arith.constant 0 : i32
    %7 = tpu.memref_slice %arg5[%c0_i32_3, %c0_i32_4] : memref<8x32xf32, #tpu.memory_space<vmem>> -> memref<1x32xf32, #tpu.memory_space<vmem>>
    %8 = tpu.memref_slice %arg6[%c0_i32_1] : memref<8x!tpu.dma_semaphore, #tpu.memory_space<semaphore_mem>> -> memref<1x!tpu.dma_semaphore, #tpu.memory_space<semaphore_mem>>
    %9 = tpu.memref_squeeze %8 : memref<1x!tpu.dma_semaphore, #tpu.memory_space<semaphore_mem>> -> memref<!tpu.dma_semaphore, #tpu.memory_space<semaphore_mem>>
    tpu.enqueue_dma source(%6 : memref<1x32xf32, #tpu.memory_space<any>>) target(%7 : memref<1x32xf32, #tpu.memory_space<vmem>>) target_semaphore(%9 : memref<!tpu.dma_semaphore, #tpu.memory_space<semaphore_mem>>)
    %c1_i32 = arith.constant 1 : i32
    %10 = arith.addi %0, %c1_i32 : i32
    %11 = arith.index_cast %10 : i32 to index
    %12 = memref.load %arg1[%11] : memref<16xi32, #tpu.memory_space<smem>>
    %c0_i32_5 = arith.constant 0 : i32
    %c63_i32_6 = arith.constant 63 : i32
    %13 = arith.maxsi %c0_i32_5, %12 : i32
    %14 = arith.minsi %c63_i32_6, %13 : i32
    %c1_i32_7 = arith.constant 1 : i32
    %c0_i32_8 = arith.constant 0 : i32
    %15 = tpu.memref_slice %arg2[%14, %c0_i32_8] : memref<64x32xf32, #tpu.memory_space<any>> -> memref<1x32xf32, #tpu.memory_space<any>>
    %c1_i32_9 = arith.constant 1 : i32
    %c0_i32_10 = arith.constant 0 : i32
    %16 = tpu.memref_slice %arg5[%c1_i32_9, %c0_i32_10] : memref<8x32xf32, #tpu.memory_space<vmem>> -> memref<1x32xf32, #tpu.memory_space<vmem>>
    %17 = tpu.memref_slice %arg6[%c1_i32_7] : memref<8x!tpu.dma_semaphore, #tpu.memory_space<semaphore_mem>> -> memref<1x!tpu.dma_semaphore, #tpu.memory_space<semaphore_mem>>
    %18 = tpu.memref_squeeze %17 : memref<1x!tpu.dma_semaphore, #tpu.memory_space<semaphore_mem>> -> memref<!tpu.dma_semaphore, #tpu.memory_space<semaphore_mem>>
    tpu.enqueue_dma source(%15 : memref<1x32xf32, #tpu.memory_space<any>>) target(%16 : memref<1x32xf32, #tpu.memory_space<vmem>>) target_semaphore(%18 : memref<!tpu.dma_semaphore, #tpu.memory_space<semaphore_mem>>)
    %c2_i32 = arith.constant 2 : i32
    %19 = arith.addi %0, %c2_i32 : i32
    %20 = arith.index_cast %19 : i32 to index
    %21 = memref.load %arg1[%20] : memref<16xi32, #tpu.memory_space<smem>>
    %c0_i32_11 = arith.constant 0 : i32
    %c63_i32_12 = arith.constant 63 : i32
    %22 = arith.maxsi %c0_i32_11, %21 : i32
    %23 = arith.minsi %c63_i32_12, %22 : i32
    %c2_i32_13 = arith.constant 2 : i32
    %c0_i32_14 = arith.constant 0 : i32
    %24 = tpu.memref_slice %arg2[%23, %c0_i32_14] : memref<64x32xf32, #tpu.memory_space<any>> -> memref<1x32xf32, #tpu.memory_space<any>>
    %c2_i32_15 = arith.constant 2 : i32
    %c0_i32_16 = arith.constant 0 : i32
    %25 = tpu.memref_slice %arg5[%c2_i32_15, %c0_i32_16] : memref<8x32xf32, #tpu.memory_space<vmem>> -> memref<1x32xf32, #tpu.memory_space<vmem>>
    %26 = tpu.memref_slice %arg6[%c2_i32_13] : memref<8x!tpu.dma_semaphore, #tpu.memory_space<semaphore_mem>> -> memref<1x!tpu.dma_semaphore, #tpu.memory_space<semaphore_mem>>
    %27 = tpu.memref_squeeze %26 : memref<1x!tpu.dma_semaphore, #tpu.memory_space<semaphore_mem>> -> memref<!tpu.dma_semaphore, #tpu.memory_space<semaphore_mem>>
    tpu.enqueue_dma source(%24 : memref<1x32xf32, #tpu.memory_space<any>>) target(%25 : memref<1x32xf32, #tpu.memory_space<vmem>>) target_semaphore(%27 : memref<!tpu.dma_semaphore, #tpu.memory_space<semaphore_mem>>)
    %c3_i32 = arith.constant 3 : i32
    %28 = arith.addi %0, %c3_i32 : i32
    %29 = arith.index_cast %28 : i32 to index
    %30 = memref.load %arg1[%29] : memref<16xi32, #tpu.memory_space<smem>>
    %c0_i32_17 = arith.constant 0 : i32
    %c63_i32_18 = arith.constant 63 : i32
    %31 = arith.maxsi %c0_i32_17, %30 : i32
    %32 = arith.minsi %c63_i32_18, %31 : i32
    %c3_i32_19 = arith.constant 3 : i32
    %c0_i32_20 = arith.constant 0 : i32
    %33 = tpu.memref_slice %arg2[%32, %c0_i32_20] : memref<64x32xf32, #tpu.memory_space<any>> -> memref<1x32xf32, #tpu.memory_space<any>>
    %c3_i32_21 = arith.constant 3 : i32
    %c0_i32_22 = arith.constant 0 : i32
    %34 = tpu.memref_slice %arg5[%c3_i32_21, %c0_i32_22] : memref<8x32xf32, #tpu.memory_space<vmem>> -> memref<1x32xf32, #tpu.memory_space<vmem>>
    %35 = tpu.memref_slice %arg6[%c3_i32_19] : memref<8x!tpu.dma_semaphore, #tpu.memory_space<semaphore_mem>> -> memref<1x!tpu.dma_semaphore, #tpu.memory_space<semaphore_mem>>
    %36 = tpu.memref_squeeze %35 : memref<1x!tpu.dma_semaphore, #tpu.memory_space<semaphore_mem>> -> memref<!tpu.dma_semaphore, #tpu.memory_space<semaphore_mem>>
    tpu.enqueue_dma source(%33 : memref<1x32xf32, #tpu.memory_space<any>>) target(%34 : memref<1x32xf32, #tpu.memory_space<vmem>>) target_semaphore(%36 : memref<!tpu.dma_semaphore, #tpu.memory_space<semaphore_mem>>)
    %c4_i32 = arith.constant 4 : i32
    %37 = arith.addi %0, %c4_i32 : i32
    %38 = arith.index_cast %37 : i32 to index
    %39 = memref.load %arg1[%38] : memref<16xi32, #tpu.memory_space<smem>>
    %c0_i32_23 = arith.constant 0 : i32
    %c63_i32_24 = arith.constant 63 : i32
    %40 = arith.maxsi %c0_i32_23, %39 : i32
    %41 = arith.minsi %c63_i32_24, %40 : i32
    %c4_i32_25 = arith.constant 4 : i32
    %c0_i32_26 = arith.constant 0 : i32
    %42 = tpu.memref_slice %arg2[%41, %c0_i32_26] : memref<64x32xf32, #tpu.memory_space<any>> -> memref<1x32xf32, #tpu.memory_space<any>>
    %c4_i32_27 = arith.constant 4 : i32
    %c0_i32_28 = arith.constant 0 : i32
    %43 = tpu.memref_slice %arg5[%c4_i32_27, %c0_i32_28] : memref<8x32xf32, #tpu.memory_space<vmem>> -> memref<1x32xf32, #tpu.memory_space<vmem>>
    %44 = tpu.memref_slice %arg6[%c4_i32_25] : memref<8x!tpu.dma_semaphore, #tpu.memory_space<semaphore_mem>> -> memref<1x!tpu.dma_semaphore, #tpu.memory_space<semaphore_mem>>
    %45 = tpu.memref_squeeze %44 : memref<1x!tpu.dma_semaphore, #tpu.memory_space<semaphore_mem>> -> memref<!tpu.dma_semaphore, #tpu.memory_space<semaphore_mem>>
    tpu.enqueue_dma source(%42 : memref<1x32xf32, #tpu.memory_space<any>>) target(%43 : memref<1x32xf32, #tpu.memory_space<vmem>>) target_semaphore(%45 : memref<!tpu.dma_semaphore, #tpu.memory_space<semaphore_mem>>)
    %c5_i32 = arith.constant 5 : i32
    %46 = arith.addi %0, %c5_i32 : i32
    %47 = arith.index_cast %46 : i32 to index
    %48 = memref.load %arg1[%47] : memref<16xi32, #tpu.memory_space<smem>>
    %c0_i32_29 = arith.constant 0 : i32
    %c63_i32_30 = arith.constant 63 : i32
    %49 = arith.maxsi %c0_i32_29, %48 : i32
    %50 = arith.minsi %c63_i32_30, %49 : i32
    %c5_i32_31 = arith.constant 5 : i32
    %c0_i32_32 = arith.constant 0 : i32
    %51 = tpu.memref_slice %arg2[%50, %c0_i32_32] : memref<64x32xf32, #tpu.memory_space<any>> -> memref<1x32xf32, #tpu.memory_space<any>>
    %c5_i32_33 = arith.constant 5 : i32
    %c0_i32_34 = arith.constant 0 : i32
    %52 = tpu.memref_slice %arg5[%c5_i32_33, %c0_i32_34] : memref<8x32xf32, #tpu.memory_space<vmem>> -> memref<1x32xf32, #tpu.memory_space<vmem>>
    %53 = tpu.memref_slice %arg6[%c5_i32_31] : memref<8x!tpu.dma_semaphore, #tpu.memory_space<semaphore_mem>> -> memref<1x!tpu.dma_semaphore, #tpu.memory_space<semaphore_mem>>
    %54 = tpu.memref_squeeze %53 : memref<1x!tpu.dma_semaphore, #tpu.memory_space<semaphore_mem>> -> memref<!tpu.dma_semaphore, #tpu.memory_space<semaphore_mem>>
    tpu.enqueue_dma source(%51 : memref<1x32xf32, #tpu.memory_space<any>>) target(%52 : memref<1x32xf32, #tpu.memory_space<vmem>>) target_semaphore(%54 : memref<!tpu.dma_semaphore, #tpu.memory_space<semaphore_mem>>)
    %c6_i32 = arith.constant 6 : i32
    %55 = arith.addi %0, %c6_i32 : i32
    %56 = arith.index_cast %55 : i32 to index
    %57 = memref.load %arg1[%56] : memref<16xi32, #tpu.memory_space<smem>>
    %c0_i32_35 = arith.constant 0 : i32
    %c63_i32_36 = arith.constant 63 : i32
    %58 = arith.maxsi %c0_i32_35, %57 : i32
    %59 = arith.minsi %c63_i32_36, %58 : i32
    %c6_i32_37 = arith.constant 6 : i32
    %c0_i32_38 = arith.constant 0 : i32
    %60 = tpu.memref_slice %arg2[%59, %c0_i32_38] : memref<64x32xf32, #tpu.memory_space<any>> -> memref<1x32xf32, #tpu.memory_space<any>>
    %c6_i32_39 = arith.constant 6 : i32
    %c0_i32_40 = arith.constant 0 : i32
    %61 = tpu.memref_slice %arg5[%c6_i32_39, %c0_i32_40] : memref<8x32xf32, #tpu.memory_space<vmem>> -> memref<1x32xf32, #tpu.memory_space<vmem>>
    %62 = tpu.memref_slice %arg6[%c6_i32_37] : memref<8x!tpu.dma_semaphore, #tpu.memory_space<semaphore_mem>> -> memref<1x!tpu.dma_semaphore, #tpu.memory_space<semaphore_mem>>
    %63 = tpu.memref_squeeze %62 : memref<1x!tpu.dma_semaphore, #tpu.memory_space<semaphore_mem>> -> memref<!tpu.dma_semaphore, #tpu.memory_space<semaphore_mem>>
    tpu.enqueue_dma source(%60 : memref<1x32xf32, #tpu.memory_space<any>>) target(%61 : memref<1x32xf32, #tpu.memory_space<vmem>>) target_semaphore(%63 : memref<!tpu.dma_semaphore, #tpu.memory_space<semaphore_mem>>)
    %c7_i32 = arith.constant 7 : i32
    %64 = arith.addi %0, %c7_i32 : i32
    %65 = arith.index_cast %64 : i32 to index
    %66 = memref.load %arg1[%65] : memref<16xi32, #tpu.memory_space<smem>>
    %c0_i32_41 = arith.constant 0 : i32
    %c63_i32_42 = arith.constant 63 : i32
    %67 = arith.maxsi %c0_i32_41, %66 : i32
    %68 = arith.minsi %c63_i32_42, %67 : i32
    %c7_i32_43 = arith.constant 7 : i32
    %c0_i32_44 = arith.constant 0 : i32
    %69 = tpu.memref_slice %arg2[%68, %c0_i32_44] : memref<64x32xf32, #tpu.memory_space<any>> -> memref<1x32xf32, #tpu.memory_space<any>>
    %c7_i32_45 = arith.constant 7 : i32
    %c0_i32_46 = arith.constant 0 : i32
    %70 = tpu.memref_slice %arg5[%c7_i32_45, %c0_i32_46] : memref<8x32xf32, #tpu.memory_space<vmem>> -> memref<1x32xf32, #tpu.memory_space<vmem>>
    %71 = tpu.memref_slice %arg6[%c7_i32_43] : memref<8x!tpu.dma_semaphore, #tpu.memory_space<semaphore_mem>> -> memref<1x!tpu.dma_semaphore, #tpu.memory_space<semaphore_mem>>
    %72 = tpu.memref_squeeze %71 : memref<1x!tpu.dma_semaphore, #tpu.memory_space<semaphore_mem>> -> memref<!tpu.dma_semaphore, #tpu.memory_space<semaphore_mem>>
    tpu.enqueue_dma source(%69 : memref<1x32xf32, #tpu.memory_space<any>>) target(%70 : memref<1x32xf32, #tpu.memory_space<vmem>>) target_semaphore(%72 : memref<!tpu.dma_semaphore, #tpu.memory_space<semaphore_mem>>)
    %c0_i32_47 = arith.constant 0 : i32
    %c0_i32_48 = arith.constant 0 : i32
    %73 = tpu.memref_slice %arg2[%5, %c0_i32_48] : memref<64x32xf32, #tpu.memory_space<any>> -> memref<1x32xf32, #tpu.memory_space<any>>
    %c0_i32_49 = arith.constant 0 : i32
    %c0_i32_50 = arith.constant 0 : i32
    %74 = tpu.memref_slice %arg5[%c0_i32_49, %c0_i32_50] : memref<8x32xf32, #tpu.memory_space<vmem>> -> memref<1x32xf32, #tpu.memory_space<vmem>>
    %75 = tpu.memref_slice %arg6[%c0_i32_47] : memref<8x!tpu.dma_semaphore, #tpu.memory_space<semaphore_mem>> -> memref<1x!tpu.dma_semaphore, #tpu.memory_space<semaphore_mem>>
    %76 = tpu.memref_squeeze %75 : memref<1x!tpu.dma_semaphore, #tpu.memory_space<semaphore_mem>> -> memref<!tpu.dma_semaphore, #tpu.memory_space<semaphore_mem>>
    tpu.wait_dma2 semaphore(%76 : memref<!tpu.dma_semaphore, #tpu.memory_space<semaphore_mem>>) src(%73 : memref<1x32xf32, #tpu.memory_space<any>>) dst(%74 : memref<1x32xf32, #tpu.memory_space<vmem>>)
    %c1_i32_51 = arith.constant 1 : i32
    %c0_i32_52 = arith.constant 0 : i32
    %77 = tpu.memref_slice %arg2[%14, %c0_i32_52] : memref<64x32xf32, #tpu.memory_space<any>> -> memref<1x32xf32, #tpu.memory_space<any>>
    %c1_i32_53 = arith.constant 1 : i32
    %c0_i32_54 = arith.constant 0 : i32
    %78 = tpu.memref_slice %arg5[%c1_i32_53, %c0_i32_54] : memref<8x32xf32, #tpu.memory_space<vmem>> -> memref<1x32xf32, #tpu.memory_space<vmem>>
    %79 = tpu.memref_slice %arg6[%c1_i32_51] : memref<8x!tpu.dma_semaphore, #tpu.memory_space<semaphore_mem>> -> memref<1x!tpu.dma_semaphore, #tpu.memory_space<semaphore_mem>>
    %80 = tpu.memref_squeeze %79 : memref<1x!tpu.dma_semaphore, #tpu.memory_space<semaphore_mem>> -> memref<!tpu.dma_semaphore, #tpu.memory_space<semaphore_mem>>
    tpu.wait_dma2 semaphore(%80 : memref<!tpu.dma_semaphore, #tpu.memory_space<semaphore_mem>>) src(%77 : memref<1x32xf32, #tpu.memory_space<any>>) dst(%78 : memref<1x32xf32, #tpu.memory_space<vmem>>)
    %c2_i32_55 = arith.constant 2 : i32
    %c0_i32_56 = arith.constant 0 : i32
    %81 = tpu.memref_slice %arg2[%23, %c0_i32_56] : memref<64x32xf32, #tpu.memory_space<any>> -> memref<1x32xf32, #tpu.memory_space<any>>
    %c2_i32_57 = arith.constant 2 : i32
    %c0_i32_58 = arith.constant 0 : i32
    %82 = tpu.memref_slice %arg5[%c2_i32_57, %c0_i32_58] : memref<8x32xf32, #tpu.memory_space<vmem>> -> memref<1x32xf32, #tpu.memory_space<vmem>>
    %83 = tpu.memref_slice %arg6[%c2_i32_55] : memref<8x!tpu.dma_semaphore, #tpu.memory_space<semaphore_mem>> -> memref<1x!tpu.dma_semaphore, #tpu.memory_space<semaphore_mem>>
    %84 = tpu.memref_squeeze %83 : memref<1x!tpu.dma_semaphore, #tpu.memory_space<semaphore_mem>> -> memref<!tpu.dma_semaphore, #tpu.memory_space<semaphore_mem>>
    tpu.wait_dma2 semaphore(%84 : memref<!tpu.dma_semaphore, #tpu.memory_space<semaphore_mem>>) src(%81 : memref<1x32xf32, #tpu.memory_space<any>>) dst(%82 : memref<1x32xf32, #tpu.memory_space<vmem>>)
    %c3_i32_59 = arith.constant 3 : i32
    %c0_i32_60 = arith.constant 0 : i32
    %85 = tpu.memref_slice %arg2[%32, %c0_i32_60] : memref<64x32xf32, #tpu.memory_space<any>> -> memref<1x32xf32, #tpu.memory_space<any>>
    %c3_i32_61 = arith.constant 3 : i32
    %c0_i32_62 = arith.constant 0 : i32
    %86 = tpu.memref_slice %arg5[%c3_i32_61, %c0_i32_62] : memref<8x32xf32, #tpu.memory_space<vmem>> -> memref<1x32xf32, #tpu.memory_space<vmem>>
    %87 = tpu.memref_slice %arg6[%c3_i32_59] : memref<8x!tpu.dma_semaphore, #tpu.memory_space<semaphore_mem>> -> memref<1x!tpu.dma_semaphore, #tpu.memory_space<semaphore_mem>>
    %88 = tpu.memref_squeeze %87 : memref<1x!tpu.dma_semaphore, #tpu.memory_space<semaphore_mem>> -> memref<!tpu.dma_semaphore, #tpu.memory_space<semaphore_mem>>
    tpu.wait_dma2 semaphore(%88 : memref<!tpu.dma_semaphore, #tpu.memory_space<semaphore_mem>>) src(%85 : memref<1x32xf32, #tpu.memory_space<any>>) dst(%86 : memref<1x32xf32, #tpu.memory_space<vmem>>)
    %c4_i32_63 = arith.constant 4 : i32
    %c0_i32_64 = arith.constant 0 : i32
    %89 = tpu.memref_slice %arg2[%41, %c0_i32_64] : memref<64x32xf32, #tpu.memory_space<any>> -> memref<1x32xf32, #tpu.memory_space<any>>
    %c4_i32_65 = arith.constant 4 : i32
    %c0_i32_66 = arith.constant 0 : i32
    %90 = tpu.memref_slice %arg5[%c4_i32_65, %c0_i32_66] : memref<8x32xf32, #tpu.memory_space<vmem>> -> memref<1x32xf32, #tpu.memory_space<vmem>>
    %91 = tpu.memref_slice %arg6[%c4_i32_63] : memref<8x!tpu.dma_semaphore, #tpu.memory_space<semaphore_mem>> -> memref<1x!tpu.dma_semaphore, #tpu.memory_space<semaphore_mem>>
    %92 = tpu.memref_squeeze %91 : memref<1x!tpu.dma_semaphore, #tpu.memory_space<semaphore_mem>> -> memref<!tpu.dma_semaphore, #tpu.memory_space<semaphore_mem>>
    tpu.wait_dma2 semaphore(%92 : memref<!tpu.dma_semaphore, #tpu.memory_space<semaphore_mem>>) src(%89 : memref<1x32xf32, #tpu.memory_space<any>>) dst(%90 : memref<1x32xf32, #tpu.memory_space<vmem>>)
    %c5_i32_67 = arith.constant 5 : i32
    %c0_i32_68 = arith.constant 0 : i32
    %93 = tpu.memref_slice %arg2[%50, %c0_i32_68] : memref<64x32xf32, #tpu.memory_space<any>> -> memref<1x32xf32, #tpu.memory_space<any>>
    %c5_i32_69 = arith.constant 5 : i32
    %c0_i32_70 = arith.constant 0 : i32
    %94 = tpu.memref_slice %arg5[%c5_i32_69, %c0_i32_70] : memref<8x32xf32, #tpu.memory_space<vmem>> -> memref<1x32xf32, #tpu.memory_space<vmem>>
    %95 = tpu.memref_slice %arg6[%c5_i32_67] : memref<8x!tpu.dma_semaphore, #tpu.memory_space<semaphore_mem>> -> memref<1x!tpu.dma_semaphore, #tpu.memory_space<semaphore_mem>>
    %96 = tpu.memref_squeeze %95 : memref<1x!tpu.dma_semaphore, #tpu.memory_space<semaphore_mem>> -> memref<!tpu.dma_semaphore, #tpu.memory_space<semaphore_mem>>
    tpu.wait_dma2 semaphore(%96 : memref<!tpu.dma_semaphore, #tpu.memory_space<semaphore_mem>>) src(%93 : memref<1x32xf32, #tpu.memory_space<any>>) dst(%94 : memref<1x32xf32, #tpu.memory_space<vmem>>)
    %c6_i32_71 = arith.constant 6 : i32
    %c0_i32_72 = arith.constant 0 : i32
    %97 = tpu.memref_slice %arg2[%59, %c0_i32_72] : memref<64x32xf32, #tpu.memory_space<any>> -> memref<1x32xf32, #tpu.memory_space<any>>
    %c6_i32_73 = arith.constant 6 : i32
    %c0_i32_74 = arith.constant 0 : i32
    %98 = tpu.memref_slice %arg5[%c6_i32_73, %c0_i32_74] : memref<8x32xf32, #tpu.memory_space<vmem>> -> memref<1x32xf32, #tpu.memory_space<vmem>>
    %99 = tpu.memref_slice %arg6[%c6_i32_71] : memref<8x!tpu.dma_semaphore, #tpu.memory_space<semaphore_mem>> -> memref<1x!tpu.dma_semaphore, #tpu.memory_space<semaphore_mem>>
    %100 = tpu.memref_squeeze %99 : memref<1x!tpu.dma_semaphore, #tpu.memory_space<semaphore_mem>> -> memref<!tpu.dma_semaphore, #tpu.memory_space<semaphore_mem>>
    tpu.wait_dma2 semaphore(%100 : memref<!tpu.dma_semaphore, #tpu.memory_space<semaphore_mem>>) src(%97 : memref<1x32xf32, #tpu.memory_space<any>>) dst(%98 : memref<1x32xf32, #tpu.memory_space<vmem>>)
    %c7_i32_75 = arith.constant 7 : i32
    %c0_i32_76 = arith.constant 0 : i32
    %101 = tpu.memref_slice %arg2[%68, %c0_i32_76] : memref<64x32xf32, #tpu.memory_space<any>> -> memref<1x32xf32, #tpu.memory_space<any>>
    %c7_i32_77 = arith.constant 7 : i32
    %c0_i32_78 = arith.constant 0 : i32
    %102 = tpu.memref_slice %arg5[%c7_i32_77, %c0_i32_78] : memref<8x32xf32, #tpu.memory_space<vmem>> -> memref<1x32xf32, #tpu.memory_space<vmem>>
    %103 = tpu.memref_slice %arg6[%c7_i32_75] : memref<8x!tpu.dma_semaphore, #tpu.memory_space<semaphore_mem>> -> memref<1x!tpu.dma_semaphore, #tpu.memory_space<semaphore_mem>>
    %104 = tpu.memref_squeeze %103 : memref<1x!tpu.dma_semaphore, #tpu.memory_space<semaphore_mem>> -> memref<!tpu.dma_semaphore, #tpu.memory_space<semaphore_mem>>
    tpu.wait_dma2 semaphore(%104 : memref<!tpu.dma_semaphore, #tpu.memory_space<semaphore_mem>>) src(%101 : memref<1x32xf32, #tpu.memory_space<any>>) dst(%102 : memref<1x32xf32, #tpu.memory_space<vmem>>)
    %c0 = arith.constant 0 : index
    %c0_79 = arith.constant 0 : index
    %105 = vector.load %arg5[%c0, %c0_79] : memref<8x32xf32, #tpu.memory_space<vmem>>, vector<8x32xf32>
    %c0_80 = arith.constant 0 : index
    %c0_81 = arith.constant 0 : index
    %106 = vector.load %arg3[%c0_80, %c0_81] : memref<8x32xf32, #tpu.memory_space<vmem>>, vector<8x32xf32>
    %107 = arith.addf %105, %106 : vector<8x32xf32>
    %c0_82 = arith.constant 0 : index
    %c0_83 = arith.constant 0 : index
    %108 = vector.load %arg4[%c0_82, %c0_83] : memref<8x32xf32, #tpu.memory_space<vmem>>, vector<8x32xf32>
    tpu.vector_store %arg4[%c0_82, %c0_83], %107 {strides = array<i32>} : memref<8x32xf32, #tpu.memory_space<vmem>>, vector<8x32xf32>,
    return
  }
  func.func @transform_1(%arg0: i32, %arg1: memref<16xi32, #tpu.memory_space<smem>>) -> (i32, i32) {
    %c0_i32 = arith.constant 0 : i32
    %c0_i32_0 = arith.constant 0 : i32
    return %arg0, %c0_i32 : i32, i32
  }
  func.func @transform_2(%arg0: i32, %arg1: memref<16xi32, #tpu.memory_space<smem>>) -> (i32, i32) {
    %c0_i32 = arith.constant 0 : i32
    %c0_i32_0 = arith.constant 0 : i32
    return %arg0, %c0_i32 : i32, i32
  }
}

</mosaic_0001>

<llo_original>
// kernel: tpu_custom_call.1
$region0: #{tpu_custom_call.1}
  #allocation0 [shape = 'u32[]', space=smem, size = 0x4, offset = 0x4, fixed_abs, tag = 'smem constant byte address 0x4 - core index']
  #allocation1 [shape = 'u32[144,128]{1,0:T(1,128)}', space=vmem, size = 0x12000, scoped, tag = 'internal scratch']
  #allocation2 [shape = 'f32[8,32]{1,0:T(8,128)}', space=vmem, size = 0x1000, scoped, tag = 'scratch operand']
  #allocation3 [shape = 's32[8]{0}', space=sflag, size = 0x20, scoped, tag = 'scratch operand']
  #allocation4 [shape = 's32[1]{0}', space=sflag, size = 0x4, scoped, tag = 'scoped memory for tpu_custom_call.1']
  #allocation5 [shape = 'u8[512]{0}', space=smem, size = 0x200, scoped, tag = 'prefetched SMEM operand 0']
  #allocation8 [shape = 's32[]', space=sflag, size = 0x4, offset = 0, fixed_abs, tag = 'sflag constant byte address 0x0 - dummy sync flag']
  #allocation9 [shape = 's32[]', space=sflag, size = 0x4, offset = 0, fixed_abs, tag = 'sflag constant byte address 0x0 - dummy sync flag']
  #allocation10 [shape = 's32[]', space=sflag, size = 0x4, offset = 0, fixed_abs, tag = 'sflag constant byte address 0x0 - dummy sync flag']
  #allocation11 [shape = 's32[]', space=sflag, size = 0x4, offset = 0, fixed_abs, tag = 'sflag constant byte address 0x0 - dummy sync flag']
  #allocation12 [shape = 's32[]', space=sflag, size = 0x4, offset = 0, fixed_abs, tag = 'sflag constant byte address 0x0 - dummy sync flag']
  #allocation13 [shape = 's32[]', space=sflag, size = 0x4, offset = 0, fixed_abs, tag = 'sflag constant byte address 0x0 - dummy sync flag']
  #allocation14 [shape = 's32[]', space=sflag, size = 0x4, offset = 0, fixed_abs, tag = 'sflag constant byte address 0x0 - dummy sync flag']
  #allocation15 [shape = 's32[]', space=sflag, size = 0x4, offset = 0, fixed_abs, tag = 'sflag constant byte address 0x0 - dummy sync flag']
  %s0 = inlined_call_operand.vmem [shape: s32[16], index: 0, kind: input, shape index: {}]
  %s1 = inlined_call_operand.vmem [shape: f32[64,32], index: 1, kind: input, shape index: {}]
  %s2 = inlined_call_operand.vmem [shape: f32[400,32], index: 2, kind: input, shape index: {}]
  %s3 = inlined_call_operand.hbm [shape: f32[16,32], index: 3, kind: output, shape index: {}]
  %s4 = sld [smem:[#allocation0]]
  $region277: #{tpu_custom_call.1} parent=0
    _
  %s6 = ssub.s32 1, %s4
  %s7 = scalar_select 0, %s6, %s4
  %s8 = sshll.u32 %s0, 4
  %s9 = int_to_ptr.vmem [resolvable:$true] %s8
  %11 = dma.vmem_to_smem %s9, 16, [#allocation5], [#allocation4]
  %12 = dma.done [#allocation4], 16
  %13 = sfence
  $region1: #{tpu_custom_call.1} parent=0
    #allocation6 [shape = 'u8[8192]{0}', space=vmem, size = 0x2000, scoped, tag = 'output window, operand 0']
    #allocation7 [shape = 's32[2]{0}', space=sflag, size = 0x8, scoped, tag = 'scoped memory for tpu_custom_call.1']
    %14 = vsyncpa [#allocation7], 0
    %s15 = scalar_lea.sflag [#allocation7], 1
    %16 = vsyncpa %s15, 0
    loop: start=0, step=1, limit=4
    $region2: #{tpu_custom_call.1} parent=1 // loop_pre_header
      _
    $region3: #{tpu_custom_call.1} parent=1 // loop_header
      %s18 = sphi 0, %s22
      %p19 = scmp.ge.s32.totalorder %s18, 4
      %s28 = sphi 0, %s30
      %s31 = sphi 0, %s28
      %s32 = sphi 0, %s31
      %s48 = sphi 0, %s32
      %s54 = sphi 0, %s56
      %s57 = sphi 0, %s54
      %s58 = sphi 0, %s57
      %s74 = sphi 0, %s58
    $region4: #{tpu_custom_call.1} parent=1 // loop_header_branch
      %21 = sbr.rel (%p19) target = $region8
    $region5: #{tpu_custom_call.1} parent=1 // loop_body
      %s23 = ssub.s32 %s18, 1
      %s24 = ssub.s32 %s18, 2
      %s25 = sadd.s32 %s18, 1
      %s26 = ssub.s32 %s18, %s25
      %p27 = scmp.eq.s32.totalorder %s26, 0
      %s29 = sadd.s32 %s28, 1
      %s30 = scalar_select %p27, %s28, %s29
      %p33 = pneg %p27
      %p34 = scmp.eq.s32.totalorder %s18, 1
      %p35 = por %p33, %p34
      %p36 = scmp.ne.s32.totalorder %s28, %s31
      %p37 = scmp.eq.s32.totalorder %s18, 0
      %p38 = por %p36, %p37
      %p39 = scmp.ne.s32.totalorder %s28, %s31
      %p40 = scmp.eq.s32.totalorder %s23, 1
      %p41 = por %p39, %p40
      %p42 = scmp.ne.s32.totalorder %s31, %s32
      %p43 = scmp.eq.s32.totalorder %s23, 0
      %p44 = por %p42, %p43
      %p45 = scmp.ne.s32.totalorder %s31, %s32
      %p46 = scmp.eq.s32.totalorder %s24, 1
      %p47 = por %p45, %p46
      %p49 = scmp.ne.s32.totalorder %s32, %s48
      %p50 = scmp.eq.s32.totalorder %s24, 0
      %p51 = por %p49, %p50
      %s52 = ssub.s32 %s18, %s25
      %p53 = scmp.eq.s32.totalorder %s52, 0
      %s55 = sadd.s32 %s54, 1
      %s56 = scalar_select %p53, %s54, %s55
      %p59 = pneg %p53
      %p60 = scmp.eq.s32.totalorder %s18, 1
      %p61 = por %p59, %p60
      %p62 = scmp.ne.s32.totalorder %s54, %s57
      %p63 = scmp.eq.s32.totalorder %s18, 0
      %p64 = por %p62, %p63
      %p65 = scmp.ne.s32.totalorder %s54, %s57
      %p66 = scmp.eq.s32.totalorder %s23, 1
      %p67 = por %p65, %p66
      %p68 = scmp.ne.s32.totalorder %s57, %s58
      %p69 = scmp.eq.s32.totalorder %s23, 0
      %p70 = por %p68, %p69
      %p71 = scmp.ne.s32.totalorder %s57, %s58
      %p72 = scmp.eq.s32.totalorder %s24, 1
      %p73 = por %p71, %p72
      %p75 = scmp.ne.s32.totalorder %s58, %s74
      %p76 = scmp.eq.s32.totalorder %s24, 0
      %p77 = por %p75, %p76
      %p78 = scmp.le.s32.totalorder 1, %s18
      %p79 = scmp.lt.s32.totalorder %s18, 3
      %p80 = pnand %p78, %p79
      %p81 = pneg %p80
      // Predicated region
      $region9: #{tpu_custom_call.1} parent=5 // pred_check
        _
      $region10: #{tpu_custom_call.1} parent=5 // pred_check_branch
        %83 = sbr.rel (%p80) target = $region12
      $region11: #{tpu_custom_call.1} parent=5 // pred_region
        %s84 = ssub.s32 %s18, 1
      $region12: #{tpu_custom_call.1} parent=5 // pred_fallthru
        _
      %p85 = scmp.lt.s32.totalorder %s18, 2
      // Predicated region
      $region13: #{tpu_custom_call.1} parent=5 // pred_check
        %p86 = pneg %p85
      $region14: #{tpu_custom_call.1} parent=5 // pred_check_branch
        %88 = sbr.rel (%p86) target = $region16
      $region15: #{tpu_custom_call.1} parent=5 // pred_region
        // Predicated region
        $region17: #{tpu_custom_call.1} parent=15 // pred_check
          %p89 = pneg %p38
        $region18: #{tpu_custom_call.1} parent=15 // pred_check_branch
          %91 = sbr.rel (%p89) target = $region20
        $region19: #{tpu_custom_call.1} parent=15 // pred_region
          %p92 = scmp.lt.s32.totalorder %s18, 49
          %s93 = scalar_select %p92, %s18, 49
          %s94 = smul.addr %s93, 8
          %s95 = scalar_lea.vmem %s2, %s94
        $region20: #{tpu_custom_call.1} parent=15 // pred_fallthru
          _
      $region16: #{tpu_custom_call.1} parent=5 // pred_fallthru
        _
      %p96 = scmp.le.s32.totalorder 1, %s18
      %p97 = scmp.lt.s32.totalorder %s18, 3
      %p98 = pnand %p96, %p97
      %p99 = pneg %p98
      // Predicated region
      $region21: #{tpu_custom_call.1} parent=5 // pred_check
        _
      $region22: #{tpu_custom_call.1} parent=5 // pred_check_branch
        %101 = sbr.rel (%p98) target = $region24
      $region23: #{tpu_custom_call.1} parent=5 // pred_region
        %s102 = ssub.s32 %s18, 1
        %p103 = scmp.lt.s32.totalorder %s23, 49
        %s104 = scalar_select %p103, %s23, 49
        %s105 = smul.addr %s104, 8
        %s106 = scalar_lea.vmem %s2, %s105
        %p107 = pneg %p44
        %p108 = pneg %p41
        %p109 = pneg %p70
        %p110 = pneg %p67
        %s111 = sand.u32 %s57, 1
        %s112 = scalar_lea.sflag [#allocation7], %s111
        %s113 = sand.u32 %s57, 1
        %s114 = smul.addr %s113, 8
        %s115 = scalar_lea.vmem [#allocation6], %s114
        %p116 = scmp.lt.s32.totalorder %s23, 49
        %s117 = scalar_select %p116, %s23, 49
        %s118 = smul.addr %s117, 8
        %s119 = scalar_lea.vmem %s2, %s118
        %s120 = smul.u32 %s23, 8
        %s121 = sld [smem:[#allocation5 + %s120]]
        %p122 = scmp.gt.s32.totalorder %s121, 0
        %s123 = scalar_select %p122, %s121, 0
        %p124 = scmp.lt.s32.totalorder %s123, 63
        %s125 = scalar_select %p124, %s123, 63
        %s126 = scalar_lea.vmem %s1, %s125
        %p128 = scmp.lt.u32.totalorder 1, 8
        %p129 = pneg %p128
        // Predicated region
        $region25: #{tpu_custom_call.1} parent=23 // pred_check
          _
        $region26: #{tpu_custom_call.1} parent=23 // pred_check_branch
          %131 = sbr.rel (%p128) target = $region28
        $region27: #{tpu_custom_call.1} parent=23 // pred_region
          %s147 = sand.u32 1, 7
          %p148 = scmp.eq.s32.totalorder %s147, 0
          %p149 = pneg %p148
          // Predicated region
          $region40: #{tpu_custom_call.1} parent=27 // pred_check
            _
          $region41: #{tpu_custom_call.1} parent=27 // pred_check_branch
            %151 = sbr.rel (%p148) target = $region43
          $region42: #{tpu_custom_call.1} parent=27 // pred_region
            %s152 = sand.u32 1, 7
            %s153 = ssub.s32 1, %s152
            %s154 = scalar_lea.vmem %s126, %s153
            %s155 = ssub.s32 1, %s152
            %s156 = scalar_lea.vmem [#allocation2], %s155
            %s157 = sshll.u32 1, %s152
            %s158 = ssub.s32 %s157, 1
            loop: start=0, step=1, limit=1
            $region44: #{tpu_custom_call.1} parent=42 // loop_pre_header
              _
            $region45: #{tpu_custom_call.1} parent=42 // loop_header
              %s160 = sphi 0, %s164
              %p161 = scmp.ge.s32.totalorder %s160, 1
              %s165 = sphi %s154, %s154
              %s166 = sphi %s156, %s156
            $region46: #{tpu_custom_call.1} parent=42 // loop_header_branch
              %163 = sbr.rel (%p161) target = $region50
            $region47: #{tpu_custom_call.1} parent=42 // loop_body
              %v167 = vld [vmem:[%s165] sm:%s158]
              %168 = vst [vmem:[%s166] sm:%s158] %v167
            $region48: #{tpu_custom_call.1} parent=42 // loop_footer
              %s164 = sadd.s32 1, %s160
            $region49: #{tpu_custom_call.1} parent=42 // loop_footer_branch
              %159 = sbr.rel target = $region45
            $region50: #{tpu_custom_call.1} parent=42 // loop_exit
              _
          $region43: #{tpu_custom_call.1} parent=27 // pred_fallthru
            _
        $region28: #{tpu_custom_call.1} parent=23 // pred_fallthru
          _
        // Predicated region
        $region29: #{tpu_custom_call.1} parent=23 // pred_check
          %p132 = pneg %p128
        $region30: #{tpu_custom_call.1} parent=23 // pred_check_branch
          %134 = sbr.rel (%p132) target = $region32
        $region31: #{tpu_custom_call.1} parent=23 // pred_region
          %s135 = sshll.u32 1, 1
          %s136 = ssub.s32 %s135, 1
          loop: start=0, step=1, limit=1
          $region33: #{tpu_custom_call.1} parent=31 // loop_pre_header
            _
          $region34: #{tpu_custom_call.1} parent=31 // loop_header
            %s138 = sphi 0, %s142
            %p139 = scmp.ge.s32.totalorder %s138, 1
            %s143 = sphi %s126, %s126
            %s144 = sphi [#allocation2], [#allocation2]
          $region35: #{tpu_custom_call.1} parent=31 // loop_header_branch
            %141 = sbr.rel (%p139) target = $region39
          $region36: #{tpu_custom_call.1} parent=31 // loop_body
            %v145 = vld [vmem:[%s143] sm:%s136]
            %146 = vst [vmem:[%s144] sm:%s136] %v145
          $region37: #{tpu_custom_call.1} parent=31 // loop_footer
            %s142 = sadd.s32 1, %s138
          $region38: #{tpu_custom_call.1} parent=31 // loop_footer_branch
            %137 = sbr.rel target = $region34
          $region39: #{tpu_custom_call.1} parent=31 // loop_exit
            _
        $region32: #{tpu_custom_call.1} parent=23 // pred_fallthru
          _
        // Predicated region
        $region51: #{tpu_custom_call.1} parent=23 // pred_check
          _
        $region52: #{tpu_custom_call.1} parent=23 // pred_check_branch
          %171 = sbr.rel (0) target = $region54
        $region53: #{tpu_custom_call.1} parent=23 // pred_region
          %172 = vsyncadd [#allocation3], 16
        $region54: #{tpu_custom_call.1} parent=23 // pred_fallthru
          _
        %s173 = sadd.s32 %s120, 1
        %s174 = sld [smem:[#allocation5 + %s173]]
        %p175 = scmp.gt.s32.totalorder %s174, 0
        %s176 = scalar_select %p175, %s174, 0
        %p177 = scmp.lt.s32.totalorder %s176, 63
        %s178 = scalar_select %p177, %s176, 63
        %s179 = scalar_lea.vmem %s1, %s178
        %s180 = scalar_lea.vmem [#allocation2], 1
        %s181 = scalar_lea.sflag [#allocation3], 1
        %p183 = scmp.lt.u32.totalorder 1, 8
        %p184 = pneg %p183
        // Predicated region
        $region55: #{tpu_custom_call.1} parent=23 // pred_check
          _
        $region56: #{tpu_custom_call.1} parent=23 // pred_check_branch
          %186 = sbr.rel (%p183) target = $region58
        $region57: #{tpu_custom_call.1} parent=23 // pred_region
          %s202 = sand.u32 1, 7
          %p203 = scmp.eq.s32.totalorder %s202, 0
          %p204 = pneg %p203
          // Predicated region
          $region70: #{tpu_custom_call.1} parent=57 // pred_check
            _
          $region71: #{tpu_custom_call.1} parent=57 // pred_check_branch
            %206 = sbr.rel (%p203) target = $region73
          $region72: #{tpu_custom_call.1} parent=57 // pred_region
            %s207 = sand.u32 1, 7
            %s208 = ssub.s32 1, %s207
            %s209 = scalar_lea.vmem %s179, %s208
            %s210 = ssub.s32 1, %s207
            %s211 = scalar_lea.vmem %s180, %s210 [#allocation2]
            %s212 = sshll.u32 1, %s207
            %s213 = ssub.s32 %s212, 1
            loop: start=0, step=1, limit=1
            $region74: #{tpu_custom_call.1} parent=72 // loop_pre_header
              _
            $region75: #{tpu_custom_call.1} parent=72 // loop_header
              %s215 = sphi 0, %s219
              %p216 = scmp.ge.s32.totalorder %s215, 1
              %s220 = sphi %s209, %s209
              %s221 = sphi %s211, %s211
            $region76: #{tpu_custom_call.1} parent=72 // loop_header_branch
              %218 = sbr.rel (%p216) target = $region80
            $region77: #{tpu_custom_call.1} parent=72 // loop_body
              %v222 = vld [vmem:[%s220] sm:%s213]
              %223 = vst [vmem:[%s221] sm:%s213] %v222
            $region78: #{tpu_custom_call.1} parent=72 // loop_footer
              %s219 = sadd.s32 1, %s215
            $region79: #{tpu_custom_call.1} parent=72 // loop_footer_branch
              %214 = sbr.rel target = $region75
            $region80: #{tpu_custom_call.1} parent=72 // loop_exit
              _
          $region73: #{tpu_custom_call.1} parent=57 // pred_fallthru
            _
        $region58: #{tpu_custom_call.1} parent=23 // pred_fallthru
          _
        // Predicated region
        $region59: #{tpu_custom_call.1} parent=23 // pred_check
          %p187 = pneg %p183
        $region60: #{tpu_custom_call.1} parent=23 // pred_check_branch
          %189 = sbr.rel (%p187) target = $region62
        $region61: #{tpu_custom_call.1} parent=23 // pred_region
          %s190 = sshll.u32 1, 1
          %s191 = ssub.s32 %s190, 1
          loop: start=0, step=1, limit=1
          $region63: #{tpu_custom_call.1} parent=61 // loop_pre_header
            _
          $region64: #{tpu_custom_call.1} parent=61 // loop_header
            %s193 = sphi 0, %s197
            %p194 = scmp.ge.s32.totalorder %s193, 1
            %s198 = sphi %s179, %s179
            %s199 = sphi %s180, %s180
          $region65: #{tpu_custom_call.1} parent=61 // loop_header_branch
            %196 = sbr.rel (%p194) target = $region69
          $region66: #{tpu_custom_call.1} parent=61 // loop_body
            %v200 = vld [vmem:[%s198] sm:%s191]
            %201 = vst [vmem:[%s199] sm:%s191] %v200
          $region67: #{tpu_custom_call.1} parent=61 // loop_footer
            %s197 = sadd.s32 1, %s193
          $region68: #{tpu_custom_call.1} parent=61 // loop_footer_branch
            %192 = sbr.rel target = $region64
          $region69: #{tpu_custom_call.1} parent=61 // loop_exit
            _
        $region62: #{tpu_custom_call.1} parent=23 // pred_fallthru
          _
        // Predicated region
        $region81: #{tpu_custom_call.1} parent=23 // pred_check
          _
        $region82: #{tpu_custom_call.1} parent=23 // pred_check_branch
          %226 = sbr.rel (0) target = $region84
        $region83: #{tpu_custom_call.1} parent=23 // pred_region
          %227 = vsyncadd %s181, 16
        $region84: #{tpu_custom_call.1} parent=23 // pred_fallthru
          _
        %s228 = sadd.s32 %s120, 2
        %s229 = sld [smem:[#allocation5 + %s228]]
        %p230 = scmp.gt.s32.totalorder %s229, 0
        %s231 = scalar_select %p230, %s229, 0
        %p232 = scmp.lt.s32.totalorder %s231, 63
        %s233 = scalar_select %p232, %s231, 63
        %s234 = scalar_lea.vmem %s1, %s233
        %s235 = scalar_lea.vmem [#allocation2], 2
        %s236 = scalar_lea.sflag [#allocation3], 2
        %p238 = scmp.lt.u32.totalorder 1, 8
        %p239 = pneg %p238
        // Predicated region
        $region85: #{tpu_custom_call.1} parent=23 // pred_check
          _
        $region86: #{tpu_custom_call.1} parent=23 // pred_check_branch
          %241 = sbr.rel (%p238) target = $region88
        $region87: #{tpu_custom_call.1} parent=23 // pred_region
          %s257 = sand.u32 1, 7
          %p258 = scmp.eq.s32.totalorder %s257, 0
          %p259 = pneg %p258
          // Predicated region
          $region100: #{tpu_custom_call.1} parent=87 // pred_check
            _
          $region101: #{tpu_custom_call.1} parent=87 // pred_check_branch
            %261 = sbr.rel (%p258) target = $region103
          $region102: #{tpu_custom_call.1} parent=87 // pred_region
            %s262 = sand.u32 1, 7
            %s263 = ssub.s32 1, %s262
            %s264 = scalar_lea.vmem %s234, %s263
            %s265 = ssub.s32 1, %s262
            %s266 = scalar_lea.vmem %s235, %s265 [#allocation2]
            %s267 = sshll.u32 1, %s262
            %s268 = ssub.s32 %s267, 1
            loop: start=0, step=1, limit=1
            $region104: #{tpu_custom_call.1} parent=102 // loop_pre_header
              _
            $region105: #{tpu_custom_call.1} parent=102 // loop_header
              %s270 = sphi 0, %s274
              %p271 = scmp.ge.s32.totalorder %s270, 1
              %s275 = sphi %s264, %s264
              %s276 = sphi %s266, %s266
            $region106: #{tpu_custom_call.1} parent=102 // loop_header_branch
              %273 = sbr.rel (%p271) target = $region110
            $region107: #{tpu_custom_call.1} parent=102 // loop_body
              %v277 = vld [vmem:[%s275] sm:%s268]
              %278 = vst [vmem:[%s276] sm:%s268] %v277
            $region108: #{tpu_custom_call.1} parent=102 // loop_footer
              %s274 = sadd.s32 1, %s270
            $region109: #{tpu_custom_call.1} parent=102 // loop_footer_branch
              %269 = sbr.rel target = $region105
            $region110: #{tpu_custom_call.1} parent=102 // loop_exit
              _
          $region103: #{tpu_custom_call.1} parent=87 // pred_fallthru
            _
        $region88: #{tpu_custom_call.1} parent=23 // pred_fallthru
          _
        // Predicated region
        $region89: #{tpu_custom_call.1} parent=23 // pred_check
          %p242 = pneg %p238
        $region90: #{tpu_custom_call.1} parent=23 // pred_check_branch
          %244 = sbr.rel (%p242) target = $region92
        $region91: #{tpu_custom_call.1} parent=23 // pred_region
          %s245 = sshll.u32 1, 1
          %s246 = ssub.s32 %s245, 1
          loop: start=0, step=1, limit=1
          $region93: #{tpu_custom_call.1} parent=91 // loop_pre_header
            _
          $region94: #{tpu_custom_call.1} parent=91 // loop_header
            %s248 = sphi 0, %s252
            %p249 = scmp.ge.s32.totalorder %s248, 1
            %s253 = sphi %s234, %s234
            %s254 = sphi %s235, %s235
          $region95: #{tpu_custom_call.1} parent=91 // loop_header_branch
            %251 = sbr.rel (%p249) target = $region99
          $region96: #{tpu_custom_call.1} parent=91 // loop_body
            %v255 = vld [vmem:[%s253] sm:%s246]
            %256 = vst [vmem:[%s254] sm:%s246] %v255
          $region97: #{tpu_custom_call.1} parent=91 // loop_footer
            %s252 = sadd.s32 1, %s248
          $region98: #{tpu_custom_call.1} parent=91 // loop_footer_branch
            %247 = sbr.rel target = $region94
          $region99: #{tpu_custom_call.1} parent=91 // loop_exit
            _
        $region92: #{tpu_custom_call.1} parent=23 // pred_fallthru
          _
        // Predicated region
        $region111: #{tpu_custom_call.1} parent=23 // pred_check
          _
        $region112: #{tpu_custom_call.1} parent=23 // pred_check_branch
          %281 = sbr.rel (0) target = $region114
        $region113: #{tpu_custom_call.1} parent=23 // pred_region
          %282 = vsyncadd %s236, 16
        $region114: #{tpu_custom_call.1} parent=23 // pred_fallthru
          _
        %s283 = sadd.s32 %s120, 3
        %s284 = sld [smem:[#allocation5 + %s283]]
        %p285 = scmp.gt.s32.totalorder %s284, 0
        %s286 = scalar_select %p285, %s284, 0
        %p287 = scmp.lt.s32.totalorder %s286, 63
        %s288 = scalar_select %p287, %s286, 63
        %s289 = scalar_lea.vmem %s1, %s288
        %s290 = scalar_lea.vmem [#allocation2], 3
        %s291 = scalar_lea.sflag [#allocation3], 3
        %p293 = scmp.lt.u32.totalorder 1, 8
        %p294 = pneg %p293
        // Predicated region
        $region115: #{tpu_custom_call.1} parent=23 // pred_check
          _
        $region116: #{tpu_custom_call.1} parent=23 // pred_check_branch
          %296 = sbr.rel (%p293) target = $region118
        $region117: #{tpu_custom_call.1} parent=23 // pred_region
          %s312 = sand.u32 1, 7
          %p313 = scmp.eq.s32.totalorder %s312, 0
          %p314 = pneg %p313
          // Predicated region
          $region130: #{tpu_custom_call.1} parent=117 // pred_check
            _
          $region131: #{tpu_custom_call.1} parent=117 // pred_check_branch
            %316 = sbr.rel (%p313) target = $region133
          $region132: #{tpu_custom_call.1} parent=117 // pred_region
            %s317 = sand.u32 1, 7
            %s318 = ssub.s32 1, %s317
            %s319 = scalar_lea.vmem %s289, %s318
            %s320 = ssub.s32 1, %s317
            %s321 = scalar_lea.vmem %s290, %s320 [#allocation2]
            %s322 = sshll.u32 1, %s317
            %s323 = ssub.s32 %s322, 1
            loop: start=0, step=1, limit=1
            $region134: #{tpu_custom_call.1} parent=132 // loop_pre_header
              _
            $region135: #{tpu_custom_call.1} parent=132 // loop_header
              %s325 = sphi 0, %s329
              %p326 = scmp.ge.s32.totalorder %s325, 1
              %s330 = sphi %s319, %s319
              %s331 = sphi %s321, %s321
            $region136: #{tpu_custom_call.1} parent=132 // loop_header_branch
              %328 = sbr.rel (%p326) target = $region140
            $region137: #{tpu_custom_call.1} parent=132 // loop_body
              %v332 = vld [vmem:[%s330] sm:%s323]
              %333 = vst [vmem:[%s331] sm:%s323] %v332
            $region138: #{tpu_custom_call.1} parent=132 // loop_footer
              %s329 = sadd.s32 1, %s325
            $region139: #{tpu_custom_call.1} parent=132 // loop_footer_branch
              %324 = sbr.rel target = $region135
            $region140: #{tpu_custom_call.1} parent=132 // loop_exit
              _
          $region133: #{tpu_custom_call.1} parent=117 // pred_fallthru
            _
        $region118: #{tpu_custom_call.1} parent=23 // pred_fallthru
          _
        // Predicated region
        $region119: #{tpu_custom_call.1} parent=23 // pred_check
          %p297 = pneg %p293
        $region120: #{tpu_custom_call.1} parent=23 // pred_check_branch
          %299 = sbr.rel (%p297) target = $region122
        $region121: #{tpu_custom_call.1} parent=23 // pred_region
          %s300 = sshll.u32 1, 1
          %s301 = ssub.s32 %s300, 1
          loop: start=0, step=1, limit=1
          $region123: #{tpu_custom_call.1} parent=121 // loop_pre_header
            _
          $region124: #{tpu_custom_call.1} parent=121 // loop_header
            %s303 = sphi 0, %s307
            %p304 = scmp.ge.s32.totalorder %s303, 1
            %s308 = sphi %s289, %s289
            %s309 = sphi %s290, %s290
          $region125: #{tpu_custom_call.1} parent=121 // loop_header_branch
            %306 = sbr.rel (%p304) target = $region129
          $region126: #{tpu_custom_call.1} parent=121 // loop_body
            %v310 = vld [vmem:[%s308] sm:%s301]
            %311 = vst [vmem:[%s309] sm:%s301] %v310
          $region127: #{tpu_custom_call.1} parent=121 // loop_footer
            %s307 = sadd.s32 1, %s303
          $region128: #{tpu_custom_call.1} parent=121 // loop_footer_branch
            %302 = sbr.rel target = $region124
          $region129: #{tpu_custom_call.1} parent=121 // loop_exit
            _
        $region122: #{tpu_custom_call.1} parent=23 // pred_fallthru
          _
        // Predicated region
        $region141: #{tpu_custom_call.1} parent=23 // pred_check
          _
        $region142: #{tpu_custom_call.1} parent=23 // pred_check_branch
          %336 = sbr.rel (0) target = $region144
        $region143: #{tpu_custom_call.1} parent=23 // pred_region
          %337 = vsyncadd %s291, 16
        $region144: #{tpu_custom_call.1} parent=23 // pred_fallthru
          _
        %s338 = sadd.s32 %s120, 4
        %s339 = sld [smem:[#allocation5 + %s338]]
        %p340 = scmp.gt.s32.totalorder %s339, 0
        %s341 = scalar_select %p340, %s339, 0
        %p342 = scmp.lt.s32.totalorder %s341, 63
        %s343 = scalar_select %p342, %s341, 63
        %s344 = scalar_lea.vmem %s1, %s343
        %s345 = scalar_lea.vmem [#allocation2], 4
        %s346 = scalar_lea.sflag [#allocation3], 4
        %p348 = scmp.lt.u32.totalorder 1, 8
        %p349 = pneg %p348
        // Predicated region
        $region145: #{tpu_custom_call.1} parent=23 // pred_check
          _
        $region146: #{tpu_custom_call.1} parent=23 // pred_check_branch
          %351 = sbr.rel (%p348) target = $region148
        $region147: #{tpu_custom_call.1} parent=23 // pred_region
          %s367 = sand.u32 1, 7
          %p368 = scmp.eq.s32.totalorder %s367, 0
          %p369 = pneg %p368
          // Predicated region
          $region160: #{tpu_custom_call.1} parent=147 // pred_check
            _
          $region161: #{tpu_custom_call.1} parent=147 // pred_check_branch
            %371 = sbr.rel (%p368) target = $region163
          $region162: #{tpu_custom_call.1} parent=147 // pred_region
            %s372 = sand.u32 1, 7
            %s373 = ssub.s32 1, %s372
            %s374 = scalar_lea.vmem %s344, %s373
            %s375 = ssub.s32 1, %s372
            %s376 = scalar_lea.vmem %s345, %s375 [#allocation2]
            %s377 = sshll.u32 1, %s372
            %s378 = ssub.s32 %s377, 1
            loop: start=0, step=1, limit=1
            $region164: #{tpu_custom_call.1} parent=162 // loop_pre_header
              _
            $region165: #{tpu_custom_call.1} parent=162 // loop_header
              %s380 = sphi 0, %s384
              %p381 = scmp.ge.s32.totalorder %s380, 1
              %s385 = sphi %s374, %s374
              %s386 = sphi %s376, %s376
            $region166: #{tpu_custom_call.1} parent=162 // loop_header_branch
              %383 = sbr.rel (%p381) target = $region170
            $region167: #{tpu_custom_call.1} parent=162 // loop_body
              %v387 = vld [vmem:[%s385] sm:%s378]
              %388 = vst [vmem:[%s386] sm:%s378] %v387
            $region168: #{tpu_custom_call.1} parent=162 // loop_footer
              %s384 = sadd.s32 1, %s380
            $region169: #{tpu_custom_call.1} parent=162 // loop_footer_branch
              %379 = sbr.rel target = $region165
            $region170: #{tpu_custom_call.1} parent=162 // loop_exit
              _
          $region163: #{tpu_custom_call.1} parent=147 // pred_fallthru
            _
        $region148: #{tpu_custom_call.1} parent=23 // pred_fallthru
          _
        // Predicated region
        $region149: #{tpu_custom_call.1} parent=23 // pred_check
          %p352 = pneg %p348
        $region150: #{tpu_custom_call.1} parent=23 // pred_check_branch
          %354 = sbr.rel (%p352) target = $region152
        $region151: #{tpu_custom_call.1} parent=23 // pred_region
          %s355 = sshll.u32 1, 1
          %s356 = ssub.s32 %s355, 1
          loop: start=0, step=1, limit=1
          $region153: #{tpu_custom_call.1} parent=151 // loop_pre_header
            _
          $region154: #{tpu_custom_call.1} parent=151 // loop_header
            %s358 = sphi 0, %s362
            %p359 = scmp.ge.s32.totalorder %s358, 1
            %s363 = sphi %s344, %s344
            %s364 = sphi %s345, %s345
          $region155: #{tpu_custom_call.1} parent=151 // loop_header_branch
            %361 = sbr.rel (%p359) target = $region159
          $region156: #{tpu_custom_call.1} parent=151 // loop_body
            %v365 = vld [vmem:[%s363] sm:%s356]
            %366 = vst [vmem:[%s364] sm:%s356] %v365
          $region157: #{tpu_custom_call.1} parent=151 // loop_footer
            %s362 = sadd.s32 1, %s358
          $region158: #{tpu_custom_call.1} parent=151 // loop_footer_branch
            %357 = sbr.rel target = $region154
          $region159: #{tpu_custom_call.1} parent=151 // loop_exit
            _
        $region152: #{tpu_custom_call.1} parent=23 // pred_fallthru
          _
        // Predicated region
        $region171: #{tpu_custom_call.1} parent=23 // pred_check
          _
        $region172: #{tpu_custom_call.1} parent=23 // pred_check_branch
          %391 = sbr.rel (0) target = $region174
        $region173: #{tpu_custom_call.1} parent=23 // pred_region
          %392 = vsyncadd %s346, 16
        $region174: #{tpu_custom_call.1} parent=23 // pred_fallthru
          _
        %s393 = sadd.s32 %s120, 5
        %s394 = sld [smem:[#allocation5 + %s393]]
        %p395 = scmp.gt.s32.totalorder %s394, 0
        %s396 = scalar_select %p395, %s394, 0
        %p397 = scmp.lt.s32.totalorder %s396, 63
        %s398 = scalar_select %p397, %s396, 63
        %s399 = scalar_lea.vmem %s1, %s398
        %s400 = scalar_lea.vmem [#allocation2], 5
        %s401 = scalar_lea.sflag [#allocation3], 5
        %p403 = scmp.lt.u32.totalorder 1, 8
        %p404 = pneg %p403
        // Predicated region
        $region175: #{tpu_custom_call.1} parent=23 // pred_check
          _
        $region176: #{tpu_custom_call.1} parent=23 // pred_check_branch
          %406 = sbr.rel (%p403) target = $region178
        $region177: #{tpu_custom_call.1} parent=23 // pred_region
          %s422 = sand.u32 1, 7
          %p423 = scmp.eq.s32.totalorder %s422, 0
          %p424 = pneg %p423
          // Predicated region
          $region190: #{tpu_custom_call.1} parent=177 // pred_check
            _
          $region191: #{tpu_custom_call.1} parent=177 // pred_check_branch
            %426 = sbr.rel (%p423) target = $region193
          $region192: #{tpu_custom_call.1} parent=177 // pred_region
            %s427 = sand.u32 1, 7
            %s428 = ssub.s32 1, %s427
            %s429 = scalar_lea.vmem %s399, %s428
            %s430 = ssub.s32 1, %s427
            %s431 = scalar_lea.vmem %s400, %s430 [#allocation2]
            %s432 = sshll.u32 1, %s427
            %s433 = ssub.s32 %s432, 1
            loop: start=0, step=1, limit=1
            $region194: #{tpu_custom_call.1} parent=192 // loop_pre_header
              _
            $region195: #{tpu_custom_call.1} parent=192 // loop_header
              %s435 = sphi 0, %s439
              %p436 = scmp.ge.s32.totalorder %s435, 1
              %s440 = sphi %s429, %s429
              %s441 = sphi %s431, %s431
            $region196: #{tpu_custom_call.1} parent=192 // loop_header_branch
              %438 = sbr.rel (%p436) target = $region200
            $region197: #{tpu_custom_call.1} parent=192 // loop_body
              %v442 = vld [vmem:[%s440] sm:%s433]
              %443 = vst [vmem:[%s441] sm:%s433] %v442
            $region198: #{tpu_custom_call.1} parent=192 // loop_footer
              %s439 = sadd.s32 1, %s435
            $region199: #{tpu_custom_call.1} parent=192 // loop_footer_branch
              %434 = sbr.rel target = $region195
            $region200: #{tpu_custom_call.1} parent=192 // loop_exit
              _
          $region193: #{tpu_custom_call.1} parent=177 // pred_fallthru
            _
        $region178: #{tpu_custom_call.1} parent=23 // pred_fallthru
          _
        // Predicated region
        $region179: #{tpu_custom_call.1} parent=23 // pred_check
          %p407 = pneg %p403
        $region180: #{tpu_custom_call.1} parent=23 // pred_check_branch
          %409 = sbr.rel (%p407) target = $region182
        $region181: #{tpu_custom_call.1} parent=23 // pred_region
          %s410 = sshll.u32 1, 1
          %s411 = ssub.s32 %s410, 1
          loop: start=0, step=1, limit=1
          $region183: #{tpu_custom_call.1} parent=181 // loop_pre_header
            _
          $region184: #{tpu_custom_call.1} parent=181 // loop_header
            %s413 = sphi 0, %s417
            %p414 = scmp.ge.s32.totalorder %s413, 1
            %s418 = sphi %s399, %s399
            %s419 = sphi %s400, %s400
          $region185: #{tpu_custom_call.1} parent=181 // loop_header_branch
            %416 = sbr.rel (%p414) target = $region189
          $region186: #{tpu_custom_call.1} parent=181 // loop_body
            %v420 = vld [vmem:[%s418] sm:%s411]
            %421 = vst [vmem:[%s419] sm:%s411] %v420
          $region187: #{tpu_custom_call.1} parent=181 // loop_footer
            %s417 = sadd.s32 1, %s413
          $region188: #{tpu_custom_call.1} parent=181 // loop_footer_branch
            %412 = sbr.rel target = $region184
          $region189: #{tpu_custom_call.1} parent=181 // loop_exit
            _
        $region182: #{tpu_custom_call.1} parent=23 // pred_fallthru
          _
        // Predicated region
        $region201: #{tpu_custom_call.1} parent=23 // pred_check
          _
        $region202: #{tpu_custom_call.1} parent=23 // pred_check_branch
          %446 = sbr.rel (0) target = $region204
        $region203: #{tpu_custom_call.1} parent=23 // pred_region
          %447 = vsyncadd %s401, 16
        $region204: #{tpu_custom_call.1} parent=23 // pred_fallthru
          _
        %s448 = sadd.s32 %s120, 6
        %s449 = sld [smem:[#allocation5 + %s448]]
        %p450 = scmp.gt.s32.totalorder %s449, 0
        %s451 = scalar_select %p450, %s449, 0
        %p452 = scmp.lt.s32.totalorder %s451, 63
        %s453 = scalar_select %p452, %s451, 63
        %s454 = scalar_lea.vmem %s1, %s453
        %s455 = scalar_lea.vmem [#allocation2], 6
        %s456 = scalar_lea.sflag [#allocation3], 6
        %p458 = scmp.lt.u32.totalorder 1, 8
        %p459 = pneg %p458
        // Predicated region
        $region205: #{tpu_custom_call.1} parent=23 // pred_check
          _
        $region206: #{tpu_custom_call.1} parent=23 // pred_check_branch
          %461 = sbr.rel (%p458) target = $region208
        $region207: #{tpu_custom_call.1} parent=23 // pred_region
          %s477 = sand.u32 1, 7
          %p478 = scmp.eq.s32.totalorder %s477, 0
          %p479 = pneg %p478
          // Predicated region
          $region220: #{tpu_custom_call.1} parent=207 // pred_check
            _
          $region221: #{tpu_custom_call.1} parent=207 // pred_check_branch
            %481 = sbr.rel (%p478) target = $region223
          $region222: #{tpu_custom_call.1} parent=207 // pred_region
            %s482 = sand.u32 1, 7
            %s483 = ssub.s32 1, %s482
            %s484 = scalar_lea.vmem %s454, %s483
            %s485 = ssub.s32 1, %s482
            %s486 = scalar_lea.vmem %s455, %s485 [#allocation2]
            %s487 = sshll.u32 1, %s482
            %s488 = ssub.s32 %s487, 1
            loop: start=0, step=1, limit=1
            $region224: #{tpu_custom_call.1} parent=222 // loop_pre_header
              _
            $region225: #{tpu_custom_call.1} parent=222 // loop_header
              %s490 = sphi 0, %s494
              %p491 = scmp.ge.s32.totalorder %s490, 1
              %s495 = sphi %s484, %s484
              %s496 = sphi %s486, %s486
            $region226: #{tpu_custom_call.1} parent=222 // loop_header_branch
              %493 = sbr.rel (%p491) target = $region230
            $region227: #{tpu_custom_call.1} parent=222 // loop_body
              %v497 = vld [vmem:[%s495] sm:%s488]
              %498 = vst [vmem:[%s496] sm:%s488] %v497
            $region228: #{tpu_custom_call.1} parent=222 // loop_footer
              %s494 = sadd.s32 1, %s490
            $region229: #{tpu_custom_call.1} parent=222 // loop_footer_branch
              %489 = sbr.rel target = $region225
            $region230: #{tpu_custom_call.1} parent=222 // loop_exit
              _
          $region223: #{tpu_custom_call.1} parent=207 // pred_fallthru
            _
        $region208: #{tpu_custom_call.1} parent=23 // pred_fallthru
          _
        // Predicated region
        $region209: #{tpu_custom_call.1} parent=23 // pred_check
          %p462 = pneg %p458
        $region210: #{tpu_custom_call.1} parent=23 // pred_check_branch
          %464 = sbr.rel (%p462) target = $region212
        $region211: #{tpu_custom_call.1} parent=23 // pred_region
          %s465 = sshll.u32 1, 1
          %s466 = ssub.s32 %s465, 1
          loop: start=0, step=1, limit=1
          $region213: #{tpu_custom_call.1} parent=211 // loop_pre_header
            _
          $region214: #{tpu_custom_call.1} parent=211 // loop_header
            %s468 = sphi 0, %s472
            %p469 = scmp.ge.s32.totalorder %s468, 1
            %s473 = sphi %s454, %s454
            %s474 = sphi %s455, %s455
          $region215: #{tpu_custom_call.1} parent=211 // loop_header_branch
            %471 = sbr.rel (%p469) target = $region219
          $region216: #{tpu_custom_call.1} parent=211 // loop_body
            %v475 = vld [vmem:[%s473] sm:%s466]
            %476 = vst [vmem:[%s474] sm:%s466] %v475
          $region217: #{tpu_custom_call.1} parent=211 // loop_footer
            %s472 = sadd.s32 1, %s468
          $region218: #{tpu_custom_call.1} parent=211 // loop_footer_branch
            %467 = sbr.rel target = $region214
          $region219: #{tpu_custom_call.1} parent=211 // loop_exit
            _
        $region212: #{tpu_custom_call.1} parent=23 // pred_fallthru
          _
        // Predicated region
        $region231: #{tpu_custom_call.1} parent=23 // pred_check
          _
        $region232: #{tpu_custom_call.1} parent=23 // pred_check_branch
          %501 = sbr.rel (0) target = $region234
        $region233: #{tpu_custom_call.1} parent=23 // pred_region
          %502 = vsyncadd %s456, 16
        $region234: #{tpu_custom_call.1} parent=23 // pred_fallthru
          _
        %s503 = sadd.s32 %s120, 7
        %s504 = sld [smem:[#allocation5 + %s503]]
        %p505 = scmp.gt.s32.totalorder %s504, 0
        %s506 = scalar_select %p505, %s504, 0
        %p507 = scmp.lt.s32.totalorder %s506, 63
        %s508 = scalar_select %p507, %s506, 63
        %s509 = scalar_lea.vmem %s1, %s508
        %s510 = scalar_lea.vmem [#allocation2], 7
        %s511 = scalar_lea.sflag [#allocation3], 7
        %p513 = scmp.lt.u32.totalorder 1, 8
        %p514 = pneg %p513
        // Predicated region
        $region235: #{tpu_custom_call.1} parent=23 // pred_check
          _
        $region236: #{tpu_custom_call.1} parent=23 // pred_check_branch
          %516 = sbr.rel (%p513) target = $region238
        $region237: #{tpu_custom_call.1} parent=23 // pred_region
          %s532 = sand.u32 1, 7
          %p533 = scmp.eq.s32.totalorder %s532, 0
          %p534 = pneg %p533
          // Predicated region
          $region250: #{tpu_custom_call.1} parent=237 // pred_check
            _
          $region251: #{tpu_custom_call.1} parent=237 // pred_check_branch
            %536 = sbr.rel (%p533) target = $region253
          $region252: #{tpu_custom_call.1} parent=237 // pred_region
            %s537 = sand.u32 1, 7
            %s538 = ssub.s32 1, %s537
            %s539 = scalar_lea.vmem %s509, %s538
            %s540 = ssub.s32 1, %s537
            %s541 = scalar_lea.vmem %s510, %s540 [#allocation2]
            %s542 = sshll.u32 1, %s537
            %s543 = ssub.s32 %s542, 1
            loop: start=0, step=1, limit=1
            $region254: #{tpu_custom_call.1} parent=252 // loop_pre_header
              _
            $region255: #{tpu_custom_call.1} parent=252 // loop_header
              %s545 = sphi 0, %s549
              %p546 = scmp.ge.s32.totalorder %s545, 1
              %s550 = sphi %s539, %s539
              %s551 = sphi %s541, %s541
            $region256: #{tpu_custom_call.1} parent=252 // loop_header_branch
              %548 = sbr.rel (%p546) target = $region260
            $region257: #{tpu_custom_call.1} parent=252 // loop_body
              %v552 = vld [vmem:[%s550] sm:%s543]
              %553 = vst [vmem:[%s551] sm:%s543] %v552
            $region258: #{tpu_custom_call.1} parent=252 // loop_footer
              %s549 = sadd.s32 1, %s545
            $region259: #{tpu_custom_call.1} parent=252 // loop_footer_branch
              %544 = sbr.rel target = $region255
            $region260: #{tpu_custom_call.1} parent=252 // loop_exit
              _
          $region253: #{tpu_custom_call.1} parent=237 // pred_fallthru
            _
        $region238: #{tpu_custom_call.1} parent=23 // pred_fallthru
          _
        // Predicated region
        $region239: #{tpu_custom_call.1} parent=23 // pred_check
          %p517 = pneg %p513
        $region240: #{tpu_custom_call.1} parent=23 // pred_check_branch
          %519 = sbr.rel (%p517) target = $region242
        $region241: #{tpu_custom_call.1} parent=23 // pred_region
          %s520 = sshll.u32 1, 1
          %s521 = ssub.s32 %s520, 1
          loop: start=0, step=1, limit=1
          $region243: #{tpu_custom_call.1} parent=241 // loop_pre_header
            _
          $region244: #{tpu_custom_call.1} parent=241 // loop_header
            %s523 = sphi 0, %s527
            %p524 = scmp.ge.s32.totalorder %s523, 1
            %s528 = sphi %s509, %s509
            %s529 = sphi %s510, %s510
          $region245: #{tpu_custom_call.1} parent=241 // loop_header_branch
            %526 = sbr.rel (%p524) target = $region249
          $region246: #{tpu_custom_call.1} parent=241 // loop_body
            %v530 = vld [vmem:[%s528] sm:%s521]
            %531 = vst [vmem:[%s529] sm:%s521] %v530
          $region247: #{tpu_custom_call.1} parent=241 // loop_footer
            %s527 = sadd.s32 1, %s523
          $region248: #{tpu_custom_call.1} parent=241 // loop_footer_branch
            %522 = sbr.rel target = $region244
          $region249: #{tpu_custom_call.1} parent=241 // loop_exit
            _
        $region242: #{tpu_custom_call.1} parent=23 // pred_fallthru
          _
        // Predicated region
        $region261: #{tpu_custom_call.1} parent=23 // pred_check
          _
        $region262: #{tpu_custom_call.1} parent=23 // pred_check_branch
          %556 = sbr.rel (0) target = $region264
        $region263: #{tpu_custom_call.1} parent=23 // pred_region
          %557 = vsyncadd %s511, 16
        $region264: #{tpu_custom_call.1} parent=23 // pred_fallthru
          _
        %s558 = smul.u32 1, 1
        %s559 = sshll.u32 %s558, 4
        %560 = dma.done [#allocation3], %s559
        %s561 = sshll.u32 %s558, 4
        %562 = dma.done %s181, %s561
        %s563 = sshll.u32 %s558, 4
        %564 = dma.done %s236, %s563
        %s565 = sshll.u32 %s558, 4
        %566 = dma.done %s291, %s565
        %s567 = sshll.u32 %s558, 4
        %568 = dma.done %s346, %s567
        %s569 = sshll.u32 %s558, 4
        %570 = dma.done %s401, %s569
        %s571 = sshll.u32 %s558, 4
        %572 = dma.done %s456, %s571
        %s573 = sshll.u32 %s558, 4
        %574 = dma.done %s511, %s573
        %v575 = vld [vmem:[#allocation2] sm:$0xff]
        %v576 = vld [vmem:[%s119] sm:$0xff]
        %v577 = vadd.f32 %v575, %v576
        %vm578 = vcmask 261120
        %579 = vst.msk [vmem:[%s115] sm:$0xff] %vm578, %v577
        %s580 = sand.u32 %s57, 1
        %s581 = scalar_lea.sflag [#allocation7], %s580
        %s582 = sand.u32 %s57, 1
        %s583 = smul.addr %s582, 8
        %s584 = scalar_lea.vmem [#allocation6], %s583
        // Predicated region
        $region265: #{tpu_custom_call.1} parent=23 // pred_check
          %p585 = pneg %p67
        $region266: #{tpu_custom_call.1} parent=23 // pred_check_branch
          %587 = sbr.rel (%p585) target = $region268
        $region267: #{tpu_custom_call.1} parent=23 // pred_region
          %s589 = ssub.s32 128, 128
          %590 = vsyncadd %s581, %s589
          %s591 = smul.addr %s23, 128
          %s592 = scalar_lea.hbm %s3, %s591
          %s594 = sshll.u32 %s584, 4
          %s595 = int_to_ptr.vmem [resolvable:$true] %s594
          %597 = dma.vmem_to_hbm [thread:$0]  %s595, 128, %s592, %s581
        $region268: #{tpu_custom_call.1} parent=23 // pred_fallthru
          _
      $region24: #{tpu_custom_call.1} parent=5 // pred_fallthru
        _
      %p598 = scmp.le.s32.totalorder 2, %s18
      // Predicated region
      $region269: #{tpu_custom_call.1} parent=5 // pred_check
        %p599 = pneg %p598
      $region270: #{tpu_custom_call.1} parent=5 // pred_check_branch
        %601 = sbr.rel (%p599) target = $region272
      $region271: #{tpu_custom_call.1} parent=5 // pred_region
        %s602 = ssub.s32 %s18, 2
        // Predicated region
        $region273: #{tpu_custom_call.1} parent=271 // pred_check
          %p603 = pneg %p73
        $region274: #{tpu_custom_call.1} parent=271 // pred_check_branch
          %605 = sbr.rel (%p603) target = $region276
        $region275: #{tpu_custom_call.1} parent=271 // pred_region
          %s606 = sand.u32 %s58, 1
          %s607 = scalar_lea.sflag [#allocation7], %s606
          %s608 = sand.u32 %s58, 1
          %s609 = smul.addr %s608, 8
          %s610 = scalar_lea.vmem [#allocation6], %s609
          %611 = dma.done %s607, 128
        $region276: #{tpu_custom_call.1} parent=271 // pred_fallthru
          _
      $region272: #{tpu_custom_call.1} parent=5 // pred_fallthru
        _
    $region6: #{tpu_custom_call.1} parent=1 // loop_footer
      %s22 = sadd.s32 1, %s18
    $region7: #{tpu_custom_call.1} parent=1 // loop_footer_branch
      %17 = sbr.rel target = $region3
    $region8: #{tpu_custom_call.1} parent=1 // loop_exit
      _
    %612 = vsyncpa [#allocation7], 1
    %s613 = scalar_lea.sflag [#allocation7], 1
    %614 = vsyncpa %s613, 1
  %615 = vsyncmov [#allocation3]
  %s616 = vpop.sfrf %615
  %p617 = scmp.eq.s32.totalorder %s616, 0
  %p618 = pneg %p617
  %620 = shalt.err (%p618)
  %s621 = scalar_lea.sflag [#allocation3], 1
  %622 = vsyncmov %s621
  %s623 = vpop.sfrf %622
  %p624 = scmp.eq.s32.totalorder %s623, 0
  %p625 = pneg %p624
  %627 = shalt.err (%p625)
  %s628 = scalar_lea.sflag [#allocation3], 2
  %629 = vsyncmov %s628
  %s630 = vpop.sfrf %629
  %p631 = scmp.eq.s32.totalorder %s630, 0
  %p632 = pneg %p631
  %634 = shalt.err (%p632)
  %s635 = scalar_lea.sflag [#allocation3], 3
  %636 = vsyncmov %s635
  %s637 = vpop.sfrf %636
  %p638 = scmp.eq.s32.totalorder %s637, 0
  %p639 = pneg %p638
  %641 = shalt.err (%p639)
  %s642 = scalar_lea.sflag [#allocation3], 4
  %643 = vsyncmov %s642
  %s644 = vpop.sfrf %643
  %p645 = scmp.eq.s32.totalorder %s644, 0
  %p646 = pneg %p645
  %648 = shalt.err (%p646)
  %s649 = scalar_lea.sflag [#allocation3], 5
  %650 = vsyncmov %s649
  %s651 = vpop.sfrf %650
  %p652 = scmp.eq.s32.totalorder %s651, 0
  %p653 = pneg %p652
  %655 = shalt.err (%p653)
  %s656 = scalar_lea.sflag [#allocation3], 6
  %657 = vsyncmov %s656
  %s658 = vpop.sfrf %657
  %p659 = scmp.eq.s32.totalorder %s658, 0
  %p660 = pneg %p659
  %662 = shalt.err (%p660)
  %s663 = scalar_lea.sflag [#allocation3], 7
  %664 = vsyncmov %s663
  %s665 = vpop.sfrf %664
  %p666 = scmp.eq.s32.totalorder %s665, 0
  %p667 = pneg %p666
  %669 = shalt.err (%p667)

</llo_original>
